<compile_context>
chip_gen: v7x
topology: tpu7x:2x2x1
jax: 0.10.0
libtpu: 0.0.40
codegen_flags: <defaults>
</compile_context>

<pallas_src>
import functools

import jax
import jax.numpy as jnp
from jax.experimental import pallas as pl
from jax.experimental.pallas import tpu as pltpu


def _vmem_capacity_bytes() -> int:
    try:
        return int(pltpu.get_tpu_info().vmem_capacity_bytes)
    except Exception:
        return 64 * 1024 * 1024  # conservative fallback: v7x per-TensorCore VMEM


def _derive_tiling(B: int, C: int, itemsize: int):
    """Pick batch tile size (multi-block grid) and the scoped-VMEM limit."""
    cap = _vmem_capacity_bytes()
    # get_tpu_info may report per-chip capacity on v7x; clamp well under the
    # 64 MiB per-TensorCore VMEM and leave double/triple-buffer headroom.
    vmem_limit = min(int(cap * 0.75), 48 * 1024 * 1024)

    row_bytes = C * itemsize
    # ~2 MiB per input block already saturates HBM bandwidth (~85% of roofline
    # is reached around 0.5-1 MiB tiles); bigger tiles only shorten the grid
    # and raise vreg/spill pressure from the f32 temporaries.
    tb_bw = max(1, (2 * 1024 * 1024) // max(row_bytes, 1))

    # Hard VMEM cap: 2 inputs x 3 pipeline buffers at the input dtype plus
    # ~8 live f32 [tb, C] temporaries inside the body (casts, exp, shifts).
    per_row_footprint = C * (2 * 3 * itemsize + 8 * 4)
    tb_fit = int(0.85 * vmem_limit) // max(per_row_footprint, 1)

    # Keep the grid >= ~8 blocks so the pipeline has depth and both v7x
    # TensorCores get balanced work under dimension_semantics=("parallel",).
    tb_grid = max(1, B // 8)

    sub = 16 if itemsize < 4 else 8      # sublane packing: bf16 needs 16 rows
    tb = min(tb_bw, tb_grid, 512)
    tb = min(tb, max(tb_fit, sub))       # never exceed the VMEM budget (down to
                                         # one aligned tile; huge C -> see TODO)
    tb = max(tb, sub)
    tb = (tb // sub) * sub
    if tb >= B:
        tb = B                           # tiny batch: single full block is legal
    return tb, vmem_limit


def _input_block_spec(tb: int, C: int, num_blocks: int) -> pl.BlockSpec:
    """Input BlockSpec; 3-deep buffering when the grid is long enough to use it."""
    if num_blocks >= 3 and hasattr(pl, "Buffered"):
        try:
            return pl.BlockSpec((tb, C), lambda i: (i, 0),
                                pipeline_mode=pl.Buffered(3))
        except TypeError:
            pass  # older Pallas without pipeline_mode: default double-buffering
    return pl.BlockSpec((tb, C), lambda i: (i, 0))


def _distill_kl_kernel(ys_ref, yt_ref, out_ref, *, T: float, B: int, tb: int,
                       tail: bool):
    """Writes this block's KL(p_t || p_s) partial sum as a lane-dense slab."""
    inv_t = jnp.float32(1.0 / T)
    ys = ys_ref[...].astype(jnp.float32) * inv_t   # [tb, C]
    yt = yt_ref[...].astype(jnp.float32) * inv_t   # [tb, C]

    # Student: stable log-sum-exp.
    zs = ys - jnp.max(ys, axis=-1, keepdims=True)
    lse_s = jnp.log(jnp.sum(jnp.exp(zs), axis=-1, keepdims=True))    # [tb, 1]

    # Teacher: shifted exponentials.
    zt = yt - jnp.max(yt, axis=-1, keepdims=True)
    et = jnp.exp(zt)
    st = jnp.sum(et, axis=-1, keepdims=True)                         # [tb, 1]

    # Fused per-row KL:  sum_c p_t*(log_p_t - log_p_s)
    #                  = (1/st) * sum_c et*(zt - zs) - log(st) + lse_s
    num = jnp.sum(et * (zt - zs), axis=-1, keepdims=True)            # [tb, 1]
    r = pl.reciprocal(st, approx=True)          # EUP slot (free here)
    r = r * (2.0 - st * r)                      # one Newton step -> ~f32-exact
    row_kl = num * r - jnp.log(st) + lse_s                           # [tb, 1]

    if tail:
        # Only the final, partial block has padded rows; a (tb, 1) select on
        # row_kl zeroes them (safe even if padding produced NaN in those rows).
        rows = (jax.lax.broadcasted_iota(jnp.int32, row_kl.shape, 0)
                + pl.program_id(0) * tb)
        row_kl = jnp.where(rows < B, row_kl, 0.0)

    # Lane-dense (1, 1, 128) store: unmasked lane-wide vst, trivial writeback.
    out_ref[...] = jnp.broadcast_to(jnp.sum(row_kl), out_ref.shape)


def distill_kl(y_s: jax.Array, y_t: jax.Array, T: float, *,
               tb: int | None = None,
               cast_inputs_to_bf16: bool = False) -> jax.Array:
    """DistillKL forward: batchmean KL * T**2. y_s, y_t: [B, C] logits.

    The kernel is HBM-bandwidth bound; passing bf16 logits (or setting
    cast_inputs_to_bf16=True) halves input bytes and is the recommended fast
    path — in-kernel math is f32 either way.
    """
    assert y_s.shape == y_t.shape and y_s.ndim == 2
    if cast_inputs_to_bf16:
        y_s = y_s.astype(jnp.bfloat16)
        y_t = y_t.astype(jnp.bfloat16)
    B, C = y_s.shape
    itemsize = jnp.dtype(y_s.dtype).itemsize
    sub = 16 if itemsize < 4 else 8

    auto_tb, vmem_limit = _derive_tiling(B, C, itemsize)
    if tb is None:
        tb = auto_tb
    assert tb == B or tb % sub == 0, (
        f"tb must equal the batch ({B}) or be a multiple of {sub} for this dtype")

    num_blocks = -(-B // tb)
    tail = (B % tb) != 0

    kernel = functools.partial(_distill_kl_kernel, T=float(T), B=B, tb=tb,
                               tail=tail)

    cost = pl.CostEstimate(
        flops=10 * B * C,
        transcendentals=2 * B * C,
        bytes_accessed=2 * B * C * itemsize + num_blocks * 128 * 4,
    )

    partials = pl.pallas_call(
        kernel,
        out_shape=jax.ShapeDtypeStruct((num_blocks, 1, 128), jnp.float32),
        grid_spec=pltpu.PrefetchScalarGridSpec(
            num_scalar_prefetch=0,
            grid=(num_blocks,),
            in_specs=[
                _input_block_spec(tb, C, num_blocks),
                _input_block_spec(tb, C, num_blocks),
            ],
            # Disjoint per-block partial sums -> no shared accumulator -> the
            # batch axis can be sharded across TensorCores (v7x megacore).
            out_specs=pl.BlockSpec((1, 1, 128), lambda i: (i, 0, 0)),
        ),
        compiler_params=pltpu.CompilerParams(
            dimension_semantics=("parallel",),
            vmem_limit_bytes=int(vmem_limit),
        ),
        cost_estimate=cost,
    )(y_s, y_t)

    # batchmean reduction and T^2 scaling (cheap scalar glue in the wrapper).
    return (jnp.sum(partials[:, 0, 0]) / B) * (T * T)


def _reference(y_s, y_t, T):
    """Pure-JAX reference mirroring the PyTorch module."""
    log_p_s = jax.nn.log_softmax(y_s.astype(jnp.float32) / T, axis=1)
    p_t = jax.nn.softmax(y_t.astype(jnp.float32) / T, axis=1)
    log_p_t = jax.nn.log_softmax(y_t.astype(jnp.float32) / T, axis=1)
    kl = p_t * (log_p_t - log_p_s)
    return jnp.sum(kl) / y_s.shape[0] * (T * T)


if __name__ == "__main__":
    T = 4.0
    key = jax.random.PRNGKey(0)
    k1, k2, k3, k4, k5, k6 = jax.random.split(key, 6)

    # Small shape consistent with the module: logits [batch, num_classes].
    B, C = 8, 128
    y_s = jax.random.normal(k1, (B, C), dtype=jnp.float32) * 2.0
    y_t = jax.random.normal(k2, (B, C), dtype=jnp.float32) * 2.0
    loss = jax.block_until_ready(distill_kl(y_s, y_t, T))
    ref = _reference(y_s, y_t, T)
    assert jnp.allclose(loss, ref, rtol=1e-4, atol=1e-5), (loss, ref)

    # Multi-block grid + tail masking + 3-deep input buffering path.
    B2, C2 = 40, 256
    y_s2 = jax.random.normal(k3, (B2, C2), dtype=jnp.float32)
    y_t2 = jax.random.normal(k4, (B2, C2), dtype=jnp.float32)
    loss2 = jax.block_until_ready(distill_kl(y_s2, y_t2, T, tb=16))
    ref2 = _reference(y_s2, y_t2, T)
    assert jnp.allclose(loss2, ref2, rtol=1e-4, atol=1e-5), (loss2, ref2)

    # Auto-tiled multi-block grid with bf16 logits (recommended bandwidth path).
    B3, C3 = 256, 384
    y_s3 = jax.random.normal(k5, (B3, C3), dtype=jnp.float32).astype(jnp.bfloat16)
    y_t3 = jax.random.normal(k6, (B3, C3), dtype=jnp.float32).astype(jnp.bfloat16)
    loss3 = jax.block_until_ready(distill_kl(y_s3, y_t3, T))
    ref3 = _reference(y_s3, y_t3, T)   # reference also promotes bf16 -> f32
    assert jnp.allclose(loss3, ref3, rtol=1e-3, atol=1e-5), (loss3, ref3)

    print("KERNEL_OK")
</pallas_src>

<mosaic_0001>
module attributes {stable_mosaic.version = 11 : i64} {
  func.func @_distill_kl_kernel(%arg0: i32, %arg1: memref<8x128xf32, #tpu.memory_space<vmem>>, %arg2: memref<8x128xf32, #tpu.memory_space<vmem>>, %arg3: memref<1x1x128xf32, #tpu.memory_space<vmem>>) attributes {dimension_semantics = [#tpu.dimension_semantics<parallel>], iteration_bounds = array<i64: 1>, scalar_prefetch = 0 : i64, scratch_operands = 0 : i64, tpu.core_type = #tpu.core_type<tc>, window_params = [{transform_indices = @transform_0, window_bounds = array<i64: 8, 128>}, {transform_indices = @transform_1, window_bounds = array<i64: 8, 128>}, {transform_indices = @transform_2, window_bounds = array<i64: 1, 1, 128>}]} {
    %c0 = arith.constant 0 : index
    %c0_0 = arith.constant 0 : index
    %0 = vector.load %arg1[%c0, %c0_0] : memref<8x128xf32, #tpu.memory_space<vmem>>, vector<8x128xf32>
    %cst = arith.constant 2.500000e-01 : f32
    %1 = vector.broadcast %cst : f32 to vector<8x128xf32>
    %2 = arith.mulf %0, %1 : vector<8x128xf32>
    %c0_1 = arith.constant 0 : index
    %c0_2 = arith.constant 0 : index
    %3 = vector.load %arg2[%c0_1, %c0_2] : memref<8x128xf32, #tpu.memory_space<vmem>>, vector<8x128xf32>
    %cst_3 = arith.constant 2.500000e-01 : f32
    %4 = vector.broadcast %cst_3 : f32 to vector<8x128xf32>
    %5 = arith.mulf %3, %4 : vector<8x128xf32>
    %cst_4 = arith.constant dense<0xFF800000> : vector<8xf32>
    %6 = vector.multi_reduction <maximumf>, %2, %cst_4 [1] : vector<8x128xf32> to vector<8xf32>
    %7 = vector.shape_cast %6 : vector<8xf32> to vector<8x1xf32>
    %8 = vector.broadcast %7 : vector<8x1xf32> to vector<8x128xf32>
    %9 = arith.subf %2, %8 : vector<8x128xf32>
    %10 = math.exp %9 : vector<8x128xf32>
    %cst_5 = arith.constant dense<0.000000e+00> : vector<8xf32>
    %11 = vector.multi_reduction <add>, %10, %cst_5 [1] : vector<8x128xf32> to vector<8xf32>
    %12 = vector.shape_cast %11 : vector<8xf32> to vector<8x1xf32>
    %13 = math.log %12 : vector<8x1xf32>
    %cst_6 = arith.constant dense<0xFF800000> : vector<8xf32>
    %14 = vector.multi_reduction <maximumf>, %5, %cst_6 [1] : vector<8x128xf32> to vector<8xf32>
    %15 = vector.shape_cast %14 : vector<8xf32> to vector<8x1xf32>
    %16 = vector.broadcast %15 : vector<8x1xf32> to vector<8x128xf32>
    %17 = arith.subf %5, %16 : vector<8x128xf32>
    %18 = math.exp %17 : vector<8x128xf32>
    %cst_7 = arith.constant dense<0.000000e+00> : vector<8xf32>
    %19 = vector.multi_reduction <add>, %18, %cst_7 [1] : vector<8x128xf32> to vector<8xf32>
    %20 = vector.shape_cast %19 : vector<8xf32> to vector<8x1xf32>
    %21 = arith.subf %17, %9 : vector<8x128xf32>
    %22 = arith.mulf %18, %21 : vector<8x128xf32>
    %cst_8 = arith.constant dense<0.000000e+00> : vector<8xf32>
    %23 = vector.multi_reduction <add>, %22, %cst_8 [1] : vector<8x128xf32> to vector<8xf32>
    %24 = vector.shape_cast %23 : vector<8xf32> to vector<8x1xf32>
    %25 = tpu.reciprocal %20 {approx = true} : vector<8x1xf32> -> vector<8x1xf32>
    %26 = arith.mulf %20, %25 : vector<8x1xf32>
    %cst_9 = arith.constant 2.000000e+00 : f32
    %27 = vector.broadcast %cst_9 : f32 to vector<8x1xf32>
    %28 = arith.subf %27, %26 : vector<8x1xf32>
    %29 = arith.mulf %25, %28 : vector<8x1xf32>
    %30 = arith.mulf %24, %29 : vector<8x1xf32>
    %31 = math.log %20 : vector<8x1xf32>
    %32 = arith.subf %30, %31 : vector<8x1xf32>
    %33 = arith.addf %32, %13 : vector<8x1xf32>
    %34 = vector.shape_cast %33 : vector<8x1xf32> to vector<1x8x1xf32>
    %cst_10 = arith.constant dense<0.000000e+00> : vector<1xf32>
    %35 = vector.multi_reduction <add>, %34, %cst_10 [1, 2] : vector<1x8x1xf32> to vector<1xf32>
    %36 = vector.shape_cast %35 : vector<1xf32> to vector<1x1x1xf32>
    %37 = vector.extract %36[0, 0, 0] : f32 from vector<1x1x1xf32>
    %38 = vector.broadcast %37 : f32 to vector<1x1x128xf32>
    %c0_11 = arith.constant 0 : index
    %c0_12 = arith.constant 0 : index
    %c0_13 = arith.constant 0 : index
    %39 = vector.load %arg3[%c0_11, %c0_12, %c0_13] : memref<1x1x128xf32, #tpu.memory_space<vmem>>, vector<1x1x128xf32>
    tpu.vector_store %arg3[%c0_11, %c0_12, %c0_13], %38 {strides = array<i32>} : memref<1x1x128xf32, #tpu.memory_space<vmem>>, vector<1x1x128xf32>,
    return
  }
  func.func @transform_0(%arg0: i32) -> (i32, i32) {
    %c0_i32 = arith.constant 0 : i32
    %c0_i32_0 = arith.constant 0 : i32
    return %arg0, %c0_i32 : i32, i32
  }
  func.func @transform_1(%arg0: i32) -> (i32, i32) {
    %c0_i32 = arith.constant 0 : i32
    %c0_i32_0 = arith.constant 0 : i32
    return %arg0, %c0_i32 : i32, i32
  }
  func.func @transform_2(%arg0: i32) -> (i32, i32, i32) {
    %c0_i32 = arith.constant 0 : i32
    %c0_i32_0 = arith.constant 0 : i32
    %c0_i32_1 = arith.constant 0 : i32
    return %arg0, %c0_i32, %c0_i32_0 : i32, i32, i32
  }
}

</mosaic_0001>

<llo_original>
// kernel: tpu_custom_call.1
$region0: #{tpu_custom_call.1}
  #allocation0 [shape = 'u32[]', space=smem, size = 0x4, offset = 0x4, fixed_abs, tag = 'smem constant byte address 0x4 - core index']
  #allocation1 [shape = 'u32[144,128]{1,0:T(1,128)}', space=vmem, size = 0x12000, scoped, tag = 'internal scratch']
  %s0 = inlined_call_operand.hbm [shape: f32[8,128], index: 0, kind: input, shape index: {}]
  %s1 = inlined_call_operand.hbm [shape: f32[8,128], index: 1, kind: input, shape index: {}]
  %s2 = inlined_call_operand.hbm [shape: f32[1,1,128], index: 2, kind: output, shape index: {}]
  %s3 = sld [smem:[#allocation0]]
  $region26: #{tpu_custom_call.1} parent=0
    _
  %s5 = ssub.s32 1, %s3
  %s6 = scalar_select 0, %s5, %s3
  $region1: #{tpu_custom_call.1} parent=0
    #allocation2 [shape = 'u8[4096]{0}', space=vmem, size = 0x1000, scoped, tag = 'input window, operand 0, single buffered']
    #allocation3 [shape = 's32[1]{0}', space=sflag, size = 0x4, scoped, tag = 'scoped memory for tpu_custom_call.1']
    #allocation4 [shape = 's32[1]{0}', space=sflag, size = 0x4, scoped, tag = 'scoped memory for tpu_custom_call.1']
    #allocation5 [shape = 'u8[4096]{0}', space=vmem, size = 0x1000, scoped, tag = 'input window, operand 1, single buffered']
    #allocation6 [shape = 's32[1]{0}', space=sflag, size = 0x4, scoped, tag = 'scoped memory for tpu_custom_call.1']
    #allocation7 [shape = 'u8[512]{0}', space=vmem, size = 0x400, scoped, tag = 'output window, operand 0, single buffered']
    %7 = vsyncpa [#allocation3], 0
    %8 = vsyncpa [#allocation6], 0
    %9 = vsyncpa [#allocation4], 0
    // Predicated region
    $region2: #{tpu_custom_call.1} parent=1 // pred_check
      _
    $region3: #{tpu_custom_call.1} parent=1 // pred_check_branch
      %11 = sbr.rel (0) target = $region5
    $region4: #{tpu_custom_call.1} parent=1 // pred_region
      %s13 = ssub.s32 128, 128
      %14 = vsyncadd [#allocation3], %s13
      %s16 = sshll.u32 [#allocation2], 4
      %s17 = int_to_ptr.vmem [resolvable:$true] %s16
      %19 = dma.hbm_to_vmem [thread:$0]  %s0, 128, %s17, [#allocation3]
    $region5: #{tpu_custom_call.1} parent=1 // pred_fallthru
      _
    // Predicated region
    $region6: #{tpu_custom_call.1} parent=1 // pred_check
      _
    $region7: #{tpu_custom_call.1} parent=1 // pred_check_branch
      %21 = sbr.rel (0) target = $region9
    $region8: #{tpu_custom_call.1} parent=1 // pred_region
      %s23 = ssub.s32 128, 128
      %24 = vsyncadd [#allocation6], %s23
      %s26 = sshll.u32 [#allocation5], 4
      %s27 = int_to_ptr.vmem [resolvable:$true] %s26
      %29 = dma.hbm_to_vmem [thread:$0]  %s1, 128, %s27, [#allocation6]
    $region9: #{tpu_custom_call.1} parent=1 // pred_fallthru
      _
    // Predicated region
    $region10: #{tpu_custom_call.1} parent=1 // pred_check
      _
    $region11: #{tpu_custom_call.1} parent=1 // pred_check_branch
      %31 = sbr.rel (0) target = $region13
    $region12: #{tpu_custom_call.1} parent=1 // pred_region
      %32 = dma.done [#allocation3], 128
    $region13: #{tpu_custom_call.1} parent=1 // pred_fallthru
      _
    // Predicated region
    $region14: #{tpu_custom_call.1} parent=1 // pred_check
      _
    $region15: #{tpu_custom_call.1} parent=1 // pred_check_branch
      %34 = sbr.rel (0) target = $region17
    $region16: #{tpu_custom_call.1} parent=1 // pred_region
      %35 = dma.done [#allocation6], 128
    $region17: #{tpu_custom_call.1} parent=1 // pred_fallthru
      _
    %v36 = vld [vmem:[#allocation2] sm:$0xff]
    %v37 = vmul.f32 %v36, 0.25
    %v38 = vld [vmem:[#allocation5] sm:$0xff]
    %v39 = vmul.f32 %v38, 0.25
    %40 = vmax.xlane.f32.xlu0 %v37
    %v41 = vpop.xlane.xlu0 %40
    %v42 = vsub.f32 %v37, %v41
    %v43 = vmul.f32 %v42, 1.442695
    %v44 = vpow.pop %v43
    %45 = vadd.xlane.f32.xlu0 %v44
    %v46 = vpop.xlane.xlu0 %45
    %v47 = vlog2.pop %v46
    %v48 = vmul.f32 %v47, 0.6931472
    %49 = vmax.xlane.f32.xlu0 %v39
    %v50 = vpop.xlane.xlu0 %49
    %v51 = vsub.f32 %v39, %v50
    %v52 = vmul.f32 %v51, 1.442695
    %v53 = vpow.pop %v52
    %54 = vadd.xlane.f32.xlu0 %v53
    %v55 = vpop.xlane.xlu0 %54
    %v56 = vsub.f32 %v51, %v42
    %v57 = vmul.f32 %v53, %v56
    %58 = vadd.xlane.f32.xlu0 %v57
    %v59 = vpop.xlane.xlu0 %58
    %v60 = vrcp.pop %v55
    %v61 = vmul.f32 %v55, %v60
    %v62 = vsub.f32 2.0, %v61
    %v63 = vmul.f32 %v60, %v62
    %v64 = vmul.f32 %v59, %v63
    %v65 = vlog2.pop %v55
    %v66 = vmul.f32 %v65, 0.6931472
    %v67 = vsub.f32 %v64, %v66
    %v68 = vadd.f32 %v67, %v48
    %vm69 = vcmask 7168
    %v70 = vsel %vm69, %v68, 0.0
    %71 = vadd.xlane.f32.xlu0 %v70
    %v72 = vpop.xlane.xlu0 %71
    %v73 = vrot.slane %v72, 4
    %v74 = vadd.f32 %v72, %v73
    %v75 = vrot.slane %v74, 2
    %v76 = vadd.f32 %v74, %v75
    %v77 = vrot.slane %v76, 1
    %v78 = vadd.f32 %v76, %v77
    %s79 = vtos %v78
    %v80 = vstv %s79
    %81 = vst [vmem:[#allocation7] sm:$0x1] %v80
    // Predicated region
    $region18: #{tpu_custom_call.1} parent=1 // pred_check
      _
    $region19: #{tpu_custom_call.1} parent=1 // pred_check_branch
      %83 = sbr.rel (0) target = $region21
    $region20: #{tpu_custom_call.1} parent=1 // pred_region
      %s85 = ssub.s32 16, 16
      %86 = vsyncadd [#allocation4], %s85
      %s88 = sshll.u32 [#allocation7], 4
      %s89 = int_to_ptr.vmem [resolvable:$true] %s88
      %91 = dma.vmem_to_hbm [thread:$0]  %s89, 16, %s2, [#allocation4]
    $region21: #{tpu_custom_call.1} parent=1 // pred_fallthru
      _
    // Predicated region
    $region22: #{tpu_custom_call.1} parent=1 // pred_check
      _
    $region23: #{tpu_custom_call.1} parent=1 // pred_check_branch
      %93 = sbr.rel (0) target = $region25
    $region24: #{tpu_custom_call.1} parent=1 // pred_region
      %94 = dma.done [#allocation4], 16
    $region25: #{tpu_custom_call.1} parent=1 // pred_fallthru
      _
    %95 = vsyncpa [#allocation3], 1
    %96 = vsyncpa [#allocation6], 1
    %97 = vsyncpa [#allocation4], 1

</llo_original>
